<compile_context>
chip_gen: v7x
topology: tpu7x:2x2x1
jax: 0.10.0
libtpu: 0.0.40
codegen_flags: <defaults>
</compile_context>

<pallas_src>
import jax
import jax.numpy as jnp
from jax.experimental import pallas as pl
from jax.experimental.pallas import tpu as pltpu


# ---------------------------------------------------------------------------
# Kernel
# ---------------------------------------------------------------------------
def _stgcn_kernel(K, tb, cin, cout):
    """Kernel body for one batch tile.  K, tb, cin, cout are static Python ints."""

    def kernel(l2_ref, x_ref, wc_ref, bc_ref, wl_ref, bl_ref, out_ref, h_ref):
        cdt = wl_ref.dtype                       # MXU compute dtype (f32 or bf16)
        x = x_ref[0].astype(cdt)                 # [N, tb*Cin] lane-dense batch tile

        def project(t, k, init):
            # Accumulate T_k @ W_k into the f32 VMEM accumulator.  The channel
            # contraction (Cin) is tiny, so one small dot per batch element of the
            # tile -- no block-diagonal weights, no redundant MXU FLOPs.
            w_k = wc_ref[k]                      # [Cin, Cout]
            for b in range(tb):
                contrib = jnp.dot(t[:, b * cin:(b + 1) * cin].astype(cdt), w_k,
                                  preferred_element_type=jnp.float32)
                if init:
                    h_ref[:, b * cout:(b + 1) * cout] = contrib
                else:
                    h_ref[:, b * cout:(b + 1) * cout] += contrib

        # --- Chebyshev recursion, shared across the whole batch tile ------------
        project(x, 0, init=True)                 # T_0 = X  (also initializes h)
        if K > 1:
            l2 = l2_ref[...]                     # 2 * L_tilde (precomputed, invariant)
            t_prev = x.astype(jnp.float32)
            # T_1 = L_tilde @ X  ==  0.5 * (L2 @ X)  (scaling by 2 is exact in fp)
            t_cur = 0.5 * jnp.dot(l2, x, preferred_element_type=jnp.float32)
            project(t_cur, 1, init=False)
            for k in range(2, K):
                t_next = (jnp.dot(l2, t_cur.astype(cdt),
                                  preferred_element_type=jnp.float32) - t_prev)
                project(t_next, k, init=False)
                t_prev, t_cur = t_cur, t_next

        # --- bias + ReLU + output Linear, lane-dense store of the whole tile ----
        bc = bc_ref[...]                         # [1, Cout] f32
        bl = bl_ref[...]                         # [1, Cin]  f32
        wl = wl_ref[...]                         # [Cout, Cin]
        for b in range(tb):
            h_b = jnp.maximum(h_ref[:, b * cout:(b + 1) * cout] + bc, 0.0)
            y_b = jnp.dot(h_b.astype(cdt), wl,
                          preferred_element_type=jnp.float32) + bl
            out_ref[0, :, b * cin:(b + 1) * cin] = y_b.astype(out_ref.dtype)

    return kernel


# ---------------------------------------------------------------------------
# Wrapper helpers
# ---------------------------------------------------------------------------
def _pick_batch_tile(B, cin, *, min_lanes=128, max_lanes=512):
    """Batch-tile size: prefer >=2 grid steps (pipelining + v7x megacore) and a
    lane width tb*Cin of at least `min_lanes` when the batch permits."""
    divisors = [d for d in range(1, B + 1) if B % d == 0 and d * cin <= max_lanes]
    if not divisors:
        return 1
    multi = [d for d in divisors if d < B]                 # >= 2 grid iterations
    wide_multi = [d for d in multi if d * cin >= min_lanes]
    if wide_multi:
        return min(wide_multi)                             # lane-dense, most grid steps
    if multi:
        return max(multi)                                  # lane target unreachable
    return max(divisors)                                   # B == 1


def _vmem_capacity_bytes():
    # Host-side, trace-time hardware probe (128 MiB on v5e/v6e, 64 MiB per core on
    # v7x); conservative fallback if the query is unavailable.
    try:
        return int(pltpu.get_tpu_info().vmem_capacity_bytes)
    except Exception:
        return 64 << 20


def pack_activations(x, tb):
    """[B, N, C] -> [B//tb, N, tb*C] (lane-dense, batch-major columns).
    Keep this layout across stacked STGCN layers; unpack only at model exit."""
    B, N, C = x.shape
    nt = B // tb
    return x.reshape(nt, tb, N, C).transpose(0, 2, 1, 3).reshape(nt, N, tb * C)


def unpack_activations(xp, tb, C):
    nt, N, _ = xp.shape
    return xp.reshape(nt, N, tb, C).transpose(0, 2, 1, 3).reshape(nt * tb, N, C)


# ---------------------------------------------------------------------------
# Layer entry points
# ---------------------------------------------------------------------------
def stgcn_layer_packed(lap, x_packed, w_cheb, b_cheb, w_lin, b_lin, *,
                       compute_dtype=None):
    """
    lap:      [N, N]             dense scaled Laplacian (lambda_max = 2)
    x_packed: [nt, N, tb*Cin]    lane-dense activations (see pack_activations)
    w_cheb:   [K, Cin, Cout]
    b_cheb:   [1, Cout]
    w_lin:    [Cout, Cin]        (pre-transposed nn.Linear weight)
    b_lin:    [1, Cin]
    returns   [nt, N, tb*Cin]
    """
    nt, N, lane_w = x_packed.shape
    K, cin, cout = w_cheb.shape
    assert lane_w % cin == 0
    tb = lane_w // cin
    cdt = jnp.dtype(compute_dtype) if compute_dtype is not None else x_packed.dtype

    l2 = (2.0 * lap).astype(cdt)                          # 2 * L_tilde, grid-invariant
    wc = w_cheb.astype(cdt)
    wl = w_lin.astype(cdt)
    bc = b_cheb.reshape(1, cout).astype(jnp.float32)
    bl = b_lin.reshape(1, cin).astype(jnp.float32)

    # Per-generation VMEM budget (128 MiB v5e/v6e, 64 MiB v7x); leave headroom.
    act_item = x_packed.dtype.itemsize
    need = (2 * l2.nbytes                                  # L2 (pipeline buffers)
            + 4 * N * lane_w * act_item                    # x + out blocks, double-buffered
            + 2 * (wc.nbytes + wl.nbytes + bc.nbytes + bl.nbytes)
            + N * tb * cout * 4                            # f32 accumulator scratch
            + (4 << 20))
    vmem_limit = int(min(max(need, 32 << 20), int(0.9 * _vmem_capacity_bytes())))

    flops = int(nt * tb * (max(K - 1, 0) * 2 * N * N * cin   # recursion  L2 @ T_k
                           + K * 2 * N * cin * cout          # Chebyshev projection
                           + 2 * N * cout * cin))            # output Linear
    bytes_accessed = int(2 * x_packed.nbytes + l2.nbytes + wc.nbytes + wl.nbytes
                         + bc.nbytes + bl.nbytes)

    grid_spec = pltpu.PrefetchScalarGridSpec(
        num_scalar_prefetch=0,
        grid=(nt,),
        in_specs=[
            # TODO(synk): for very large N (L_tilde ~ N^2 bytes; ~2.8k nodes on v7x's
            # 64 MiB VMEM) tile the recursion over column blocks of L instead of
            # assuming whole-L residency.
            pl.BlockSpec((N, N), lambda g: (0, 0)),            # 2*L (grid-invariant)
            pl.BlockSpec((1, N, lane_w), lambda g: (g, 0, 0)),  # x batch tile
            pl.BlockSpec((K, cin, cout), lambda g: (0, 0, 0)),  # Chebyshev weights
            pl.BlockSpec((1, cout), lambda g: (0, 0)),          # Chebyshev bias (f32)
            pl.BlockSpec((cout, cin), lambda g: (0, 0)),        # Linear weight
            pl.BlockSpec((1, cin), lambda g: (0, 0)),           # Linear bias (f32)
        ],
        out_specs=pl.BlockSpec((1, N, lane_w), lambda g: (g, 0, 0)),
        scratch_shapes=[pltpu.VMEM((N, tb * cout), jnp.float32)],  # h accumulator
    )

    return pl.pallas_call(
        _stgcn_kernel(K, tb, cin, cout),
        out_shape=jax.ShapeDtypeStruct((nt, N, lane_w), x_packed.dtype),
        grid_spec=grid_spec,
        compiler_params=pltpu.CompilerParams(
            dimension_semantics=("parallel",),
            vmem_limit_bytes=vmem_limit,
        ),
        cost_estimate=pl.CostEstimate(
            flops=flops, transcendentals=0, bytes_accessed=bytes_accessed),
    )(l2, x_packed, wc, bc, wl, bl)


def stgcn_layer(lap, x, w_cheb, b_cheb, w_lin, b_lin, *, batch_tile=None,
                compute_dtype=None):
    """Convenience entry point: [B, N, Cin] in, [B, N, Cin] out.  For stacked layers
    prefer pack_activations + stgcn_layer_packed to avoid per-layer relayouts."""
    B, N, cin = x.shape
    assert w_cheb.shape[1] == cin
    tb = batch_tile if batch_tile is not None else _pick_batch_tile(B, cin)
    assert B % tb == 0, "batch tile must divide batch size"
    xp = pack_activations(x, tb)
    yp = stgcn_layer_packed(lap, xp, w_cheb, b_cheb, w_lin, b_lin,
                            compute_dtype=compute_dtype)
    return unpack_activations(yp, tb, cin)


# ---------------------------------------------------------------------------
# Pure-JAX reference + demo
# ---------------------------------------------------------------------------
def _reference(lap, x, w_cheb, b_cheb, w_lin, b_lin):
    K = w_cheb.shape[0]
    outs = []
    for i in range(x.shape[0]):
        X = x[i]
        t_prev = X
        acc = t_prev @ w_cheb[0]
        if K > 1:
            t_cur = lap @ X
            acc = acc + t_cur @ w_cheb[1]
            for k in range(2, K):
                t_next = 2.0 * (lap @ t_cur) - t_prev
                acc = acc + t_next @ w_cheb[k]
                t_prev, t_cur = t_cur, t_next
        h = jnp.maximum(acc + b_cheb, 0.0)
        outs.append(h @ w_lin + b_lin)
    return jnp.stack(outs, axis=0)


if __name__ == "__main__":
    B, N, Cin, Cout, K = 2, 16, 4, 32, 3

    key = jax.random.PRNGKey(0)
    k_x, k_wc, k_bc, k_wl, k_bl = jax.random.split(key, 5)

    # Deterministic ring graph on N nodes -> scaled Laplacian (lambda_max = 2):
    # L_tilde = -D^{-1/2} A D^{-1/2}
    idx = jnp.arange(N)
    A = (jnp.zeros((N, N))
         .at[idx, (idx + 1) % N].set(1.0)
         .at[idx, (idx - 1) % N].set(1.0))
    deg = A.sum(axis=1)
    d_inv_sqrt = 1.0 / jnp.sqrt(deg)
    lap = -(d_inv_sqrt[:, None] * A * d_inv_sqrt[None, :]).astype(jnp.float32)

    x = jax.random.normal(k_x, (B, N, Cin), dtype=jnp.float32)
    w_cheb = 0.1 * jax.random.normal(k_wc, (K, Cin, Cout), dtype=jnp.float32)
    b_cheb = 0.1 * jax.random.normal(k_bc, (1, Cout), dtype=jnp.float32)
    w_lin = 0.1 * jax.random.normal(k_wl, (Cout, Cin), dtype=jnp.float32)
    b_lin = 0.1 * jax.random.normal(k_bl, (1, Cin), dtype=jnp.float32)

    out = jax.jit(stgcn_layer)(lap, x, w_cheb, b_cheb, w_lin, b_lin)
    out = jax.block_until_ready(out)

    ref = _reference(lap, x, w_cheb, b_cheb, w_lin, b_lin)
    assert out.shape == (B, N, Cin)
    assert jnp.allclose(out, ref, atol=1e-4, rtol=1e-4), float(
        jnp.max(jnp.abs(out - ref)))

    print("KERNEL_OK")
</pallas_src>

<mosaic_0001>
module attributes {stable_mosaic.version = 11 : i64} {
  func.func @kernel(%arg0: i32, %arg1: memref<16x16xf32, #tpu.memory_space<vmem>>, %arg2: memref<1x16x4xf32, #tpu.memory_space<vmem>>, %arg3: memref<3x4x32xf32, #tpu.memory_space<vmem>>, %arg4: memref<1x32xf32, #tpu.memory_space<vmem>>, %arg5: memref<32x4xf32, #tpu.memory_space<vmem>>, %arg6: memref<1x4xf32, #tpu.memory_space<vmem>>, %arg7: memref<1x16x4xf32, #tpu.memory_space<vmem>>, %arg8: memref<16x32xf32, #tpu.memory_space<vmem>>) attributes {dimension_semantics = [#tpu.dimension_semantics<parallel>], iteration_bounds = array<i64: 2>, scalar_prefetch = 0 : i64, scratch_operands = 1 : i64, tpu.core_type = #tpu.core_type<tc>, window_params = [{pipeline_mode = #tpu.pipeline_mode<synchronous>, transform_indices = @transform_0, window_bounds = array<i64: 16, 16>}, {transform_indices = @transform_1, window_bounds = array<i64: 1, 16, 4>}, {pipeline_mode = #tpu.pipeline_mode<synchronous>, transform_indices = @transform_2, window_bounds = array<i64: 3, 4, 32>}, {pipeline_mode = #tpu.pipeline_mode<synchronous>, transform_indices = @transform_3, window_bounds = array<i64: 1, 32>}, {pipeline_mode = #tpu.pipeline_mode<synchronous>, transform_indices = @transform_4, window_bounds = array<i64: 32, 4>}, {pipeline_mode = #tpu.pipeline_mode<synchronous>, transform_indices = @transform_5, window_bounds = array<i64: 1, 4>}, {transform_indices = @transform_6, window_bounds = array<i64: 1, 16, 4>}]} {
    %c0 = arith.constant 0 : index
    %c0_0 = arith.constant 0 : index
    %c0_1 = arith.constant 0 : index
    %0 = vector.load %arg2[%c0, %c0_0, %c0_1] : memref<1x16x4xf32, #tpu.memory_space<vmem>>, vector<1x16x4xf32>
    %1 = vector.shape_cast %0 : vector<1x16x4xf32> to vector<16x4xf32>
    %c0_2 = arith.constant 0 : index
    %c0_3 = arith.constant 0 : index
    %c0_4 = arith.constant 0 : index
    %2 = vector.load %arg3[%c0_2, %c0_3, %c0_4] : memref<3x4x32xf32, #tpu.memory_space<vmem>>, vector<1x4x32xf32>
    %3 = vector.shape_cast %2 : vector<1x4x32xf32> to vector<4x32xf32>
    %cst = arith.constant dense<0.000000e+00> : vector<16x32xf32>
    %4 = tpu.matmul %1, %3, %cst {dimension_numbers = #tpu.dot_dimension_numbers<[1], [0], [0], [1], [0, 0, 1, 1], [], []>} : vector<16x4xf32>, vector<4x32xf32>, vector<16x32xf32> -> vector<16x32xf32>
    %c0_5 = arith.constant 0 : index
    %c0_6 = arith.constant 0 : index
    %5 = vector.load %arg8[%c0_5, %c0_6] : memref<16x32xf32, #tpu.memory_space<vmem>>, vector<16x32xf32>
    tpu.vector_store %arg8[%c0_5, %c0_6], %4 {strides = array<i32>} : memref<16x32xf32, #tpu.memory_space<vmem>>, vector<16x32xf32>,
    %c0_7 = arith.constant 0 : index
    %c0_8 = arith.constant 0 : index
    %6 = vector.load %arg1[%c0_7, %c0_8] : memref<16x16xf32, #tpu.memory_space<vmem>>, vector<16x16xf32>
    %cst_9 = arith.constant dense<0.000000e+00> : vector<16x4xf32>
    %7 = tpu.matmul %6, %1, %cst_9 {dimension_numbers = #tpu.dot_dimension_numbers<[1], [0], [0], [1], [0, 0, 1, 1], [], []>} : vector<16x16xf32>, vector<16x4xf32>, vector<16x4xf32> -> vector<16x4xf32>
    %cst_10 = arith.constant 5.000000e-01 : f32
    %8 = vector.broadcast %cst_10 : f32 to vector<16x4xf32>
    %9 = arith.mulf %8, %7 : vector<16x4xf32>
    %c1 = arith.constant 1 : index
    %c0_11 = arith.constant 0 : index
    %c0_12 = arith.constant 0 : index
    %10 = vector.load %arg3[%c1, %c0_11, %c0_12] : memref<3x4x32xf32, #tpu.memory_space<vmem>>, vector<1x4x32xf32>
    %11 = vector.shape_cast %10 : vector<1x4x32xf32> to vector<4x32xf32>
    %cst_13 = arith.constant dense<0.000000e+00> : vector<16x32xf32>
    %12 = tpu.matmul %9, %11, %cst_13 {dimension_numbers = #tpu.dot_dimension_numbers<[1], [0], [0], [1], [0, 0, 1, 1], [], []>} : vector<16x4xf32>, vector<4x32xf32>, vector<16x32xf32> -> vector<16x32xf32>
    %c0_14 = arith.constant 0 : index
    %c0_15 = arith.constant 0 : index
    %13 = vector.load %arg8[%c0_14, %c0_15] : memref<16x32xf32, #tpu.memory_space<vmem>>, vector<16x32xf32>
    %14 = arith.addf %13, %12 : vector<16x32xf32>
    %c0_16 = arith.constant 0 : index
    %c0_17 = arith.constant 0 : index
    %15 = vector.load %arg8[%c0_16, %c0_17] : memref<16x32xf32, #tpu.memory_space<vmem>>, vector<16x32xf32>
    tpu.vector_store %arg8[%c0_16, %c0_17], %14 {strides = array<i32>} : memref<16x32xf32, #tpu.memory_space<vmem>>, vector<16x32xf32>,
    %cst_18 = arith.constant dense<0.000000e+00> : vector<16x4xf32>
    %16 = tpu.matmul %6, %9, %cst_18 {dimension_numbers = #tpu.dot_dimension_numbers<[1], [0], [0], [1], [0, 0, 1, 1], [], []>} : vector<16x16xf32>, vector<16x4xf32>, vector<16x4xf32> -> vector<16x4xf32>
    %17 = arith.subf %16, %1 : vector<16x4xf32>
    %c2 = arith.constant 2 : index
    %c0_19 = arith.constant 0 : index
    %c0_20 = arith.constant 0 : index
    %18 = vector.load %arg3[%c2, %c0_19, %c0_20] : memref<3x4x32xf32, #tpu.memory_space<vmem>>, vector<1x4x32xf32>
    %19 = vector.shape_cast %18 : vector<1x4x32xf32> to vector<4x32xf32>
    %cst_21 = arith.constant dense<0.000000e+00> : vector<16x32xf32>
    %20 = tpu.matmul %17, %19, %cst_21 {dimension_numbers = #tpu.dot_dimension_numbers<[1], [0], [0], [1], [0, 0, 1, 1], [], []>} : vector<16x4xf32>, vector<4x32xf32>, vector<16x32xf32> -> vector<16x32xf32>
    %c0_22 = arith.constant 0 : index
    %c0_23 = arith.constant 0 : index
    %21 = vector.load %arg8[%c0_22, %c0_23] : memref<16x32xf32, #tpu.memory_space<vmem>>, vector<16x32xf32>
    %22 = arith.addf %21, %20 : vector<16x32xf32>
    %c0_24 = arith.constant 0 : index
    %c0_25 = arith.constant 0 : index
    %23 = vector.load %arg8[%c0_24, %c0_25] : memref<16x32xf32, #tpu.memory_space<vmem>>, vector<16x32xf32>
    tpu.vector_store %arg8[%c0_24, %c0_25], %22 {strides = array<i32>} : memref<16x32xf32, #tpu.memory_space<vmem>>, vector<16x32xf32>,
    %c0_26 = arith.constant 0 : index
    %c0_27 = arith.constant 0 : index
    %24 = vector.load %arg4[%c0_26, %c0_27] : memref<1x32xf32, #tpu.memory_space<vmem>>, vector<1x32xf32>
    %c0_28 = arith.constant 0 : index
    %c0_29 = arith.constant 0 : index
    %25 = vector.load %arg6[%c0_28, %c0_29] : memref<1x4xf32, #tpu.memory_space<vmem>>, vector<1x4xf32>
    %c0_30 = arith.constant 0 : index
    %c0_31 = arith.constant 0 : index
    %26 = vector.load %arg5[%c0_30, %c0_31] : memref<32x4xf32, #tpu.memory_space<vmem>>, vector<32x4xf32>
    %c0_32 = arith.constant 0 : index
    %c0_33 = arith.constant 0 : index
    %27 = vector.load %arg8[%c0_32, %c0_33] : memref<16x32xf32, #tpu.memory_space<vmem>>, vector<16x32xf32>
    %28 = vector.broadcast %24 : vector<1x32xf32> to vector<16x32xf32>
    %29 = arith.addf %27, %28 : vector<16x32xf32>
    %cst_34 = arith.constant 0.000000e+00 : f32
    %30 = vector.broadcast %cst_34 : f32 to vector<16x32xf32>
    %31 = arith.maximumf %29, %30 : vector<16x32xf32>
    %cst_35 = arith.constant dense<0.000000e+00> : vector<16x4xf32>
    %32 = tpu.matmul %31, %26, %cst_35 {dimension_numbers = #tpu.dot_dimension_numbers<[1], [0], [0], [1], [0, 0, 1, 1], [], []>} : vector<16x32xf32>, vector<32x4xf32>, vector<16x4xf32> -> vector<16x4xf32>
    %33 = vector.broadcast %25 : vector<1x4xf32> to vector<16x4xf32>
    %34 = arith.addf %32, %33 : vector<16x4xf32>
    %c0_36 = arith.constant 0 : index
    %c0_37 = arith.constant 0 : index
    %c0_38 = arith.constant 0 : index
    %35 = vector.load %arg7[%c0_36, %c0_37, %c0_38] : memref<1x16x4xf32, #tpu.memory_space<vmem>>, vector<1x16x4xf32>
    %36 = vector.shape_cast %35 : vector<1x16x4xf32> to vector<16x4xf32>
    %37 = vector.shape_cast %34 : vector<16x4xf32> to vector<1x16x4xf32>
    tpu.vector_store %arg7[%c0_36, %c0_37, %c0_38], %37 {strides = array<i32>} : memref<1x16x4xf32, #tpu.memory_space<vmem>>, vector<1x16x4xf32>,
    return
  }
  func.func @transform_0(%arg0: i32) -> (i32, i32) {
    %c0_i32 = arith.constant 0 : i32
    %c0_i32_0 = arith.constant 0 : i32
    %c0_i32_1 = arith.constant 0 : i32
    return %c0_i32, %c0_i32_0 : i32, i32
  }
  func.func @transform_1(%arg0: i32) -> (i32, i32, i32) {
    %c0_i32 = arith.constant 0 : i32
    %c0_i32_0 = arith.constant 0 : i32
    %c0_i32_1 = arith.constant 0 : i32
    return %arg0, %c0_i32, %c0_i32_0 : i32, i32, i32
  }
  func.func @transform_2(%arg0: i32) -> (i32, i32, i32) {
    %c0_i32 = arith.constant 0 : i32
    %c0_i32_0 = arith.constant 0 : i32
    %c0_i32_1 = arith.constant 0 : i32
    %c0_i32_2 = arith.constant 0 : i32
    return %c0_i32, %c0_i32_0, %c0_i32_1 : i32, i32, i32
  }
  func.func @transform_3(%arg0: i32) -> (i32, i32) {
    %c0_i32 = arith.constant 0 : i32
    %c0_i32_0 = arith.constant 0 : i32
    %c0_i32_1 = arith.constant 0 : i32
    return %c0_i32, %c0_i32_0 : i32, i32
  }
  func.func @transform_4(%arg0: i32) -> (i32, i32) {
    %c0_i32 = arith.constant 0 : i32
    %c0_i32_0 = arith.constant 0 : i32
    %c0_i32_1 = arith.constant 0 : i32
    return %c0_i32, %c0_i32_0 : i32, i32
  }
  func.func @transform_5(%arg0: i32) -> (i32, i32) {
    %c0_i32 = arith.constant 0 : i32
    %c0_i32_0 = arith.constant 0 : i32
    %c0_i32_1 = arith.constant 0 : i32
    return %c0_i32, %c0_i32_0 : i32, i32
  }
  func.func @transform_6(%arg0: i32) -> (i32, i32, i32) {
    %c0_i32 = arith.constant 0 : i32
    %c0_i32_0 = arith.constant 0 : i32
    %c0_i32_1 = arith.constant 0 : i32
    return %arg0, %c0_i32, %c0_i32_0 : i32, i32, i32
  }
}

</mosaic_0001>

<llo_original>
// kernel: stgcn_layer.1
$region0: #{stgcn_layer.1}
  #allocation0 [shape = 'u32[]', space=smem, size = 0x4, offset = 0x4, fixed_abs, tag = 'smem constant byte address 0x4 - core index']
  #allocation1 [shape = 'u32[144,128]{1,0:T(1,128)}', space=vmem, size = 0x12000, scoped, tag = 'internal scratch']
  #allocation2 [shape = 'f32[16,32]{1,0:T(8,128)}', space=vmem, size = 0x2000, scoped, tag = 'scratch operand']
  %s0 = inlined_call_operand.vmem [shape: f32[16,16], index: 0, kind: input, shape index: {}]
  %s1 = inlined_call_operand.vmem [shape: f32[2,16,4], index: 1, kind: input, shape index: {}]
  %s2 = inlined_call_operand.vmem [shape: f32[3,4,32], index: 2, kind: input, shape index: {}]
  %s3 = inlined_call_operand.vmem [shape: f32[1,32], index: 3, kind: input, shape index: {}]
  %s4 = inlined_call_operand.vmem [shape: f32[32,4], index: 4, kind: input, shape index: {}]
  %s5 = inlined_call_operand.vmem [shape: f32[1,4], index: 5, kind: input, shape index: {}]
  %s6 = inlined_call_operand.vmem [shape: f32[2,16,4], index: 6, kind: output, shape index: {}]
  %s7 = sld [smem:[#allocation0]]
  $region57: #{stgcn_layer.1} parent=0
    _
  %s9 = ssub.s32 1, %s7
  %s10 = scalar_select 0, %s9, %s7
  loop: start=0, step=1, limit=4
  $region2: #{stgcn_layer.1} parent=0 // loop_pre_header
    _
  $region3: #{stgcn_layer.1} parent=0 // loop_header
    %s12 = sphi 0, %s16
    %p13 = scmp.ge.s32.totalorder %s12, 4
    %s20 = sphi 0, %s20
    %s22 = sphi 0, %s20
    %s23 = sphi 0, %s22
    %s37 = sphi 0, %s23
    %s43 = sphi 0, %s45
    %s46 = sphi 0, %s43
    %s47 = sphi 0, %s46
    %s63 = sphi 0, %s47
    %s67 = sphi 0, %s67
    %s69 = sphi 0, %s67
    %s70 = sphi 0, %s69
    %s84 = sphi 0, %s70
    %s88 = sphi 0, %s88
    %s90 = sphi 0, %s88
    %s91 = sphi 0, %s90
    %s105 = sphi 0, %s91
    %s109 = sphi 0, %s109
    %s111 = sphi 0, %s109
    %s112 = sphi 0, %s111
    %s126 = sphi 0, %s112
    %s130 = sphi 0, %s130
    %s132 = sphi 0, %s130
    %s133 = sphi 0, %s132
    %s147 = sphi 0, %s133
    %s153 = sphi 0, %s155
    %s156 = sphi 0, %s153
    %s157 = sphi 0, %s156
    %s173 = sphi 0, %s157
  $region4: #{stgcn_layer.1} parent=0 // loop_header_branch
    %15 = sbr.rel (%p13) target = $region8
  $region5: #{stgcn_layer.1} parent=0 // loop_body
    %s17 = ssub.s32 %s12, 1
    %s18 = ssub.s32 %s12, 2
    %s19 = sadd.s32 %s12, 1
    %s21 = sadd.s32 %s20, 1
    %p24 = scmp.eq.s32.totalorder %s12, 1
    %p25 = scmp.ne.s32.totalorder %s20, %s22
    %p26 = scmp.eq.s32.totalorder %s12, 0
    %p27 = por %p25, %p26
    %p28 = scmp.ne.s32.totalorder %s20, %s22
    %p29 = scmp.eq.s32.totalorder %s17, 1
    %p30 = por %p28, %p29
    %p31 = scmp.ne.s32.totalorder %s22, %s23
    %p32 = scmp.eq.s32.totalorder %s17, 0
    %p33 = por %p31, %p32
    %p34 = scmp.ne.s32.totalorder %s22, %s23
    %p35 = scmp.eq.s32.totalorder %s18, 1
    %p36 = por %p34, %p35
    %p38 = scmp.ne.s32.totalorder %s23, %s37
    %p39 = scmp.eq.s32.totalorder %s18, 0
    %p40 = por %p38, %p39
    %s41 = ssub.s32 %s12, %s19
    %p42 = scmp.eq.s32.totalorder %s41, 0
    %s44 = sadd.s32 %s43, 1
    %s45 = scalar_select %p42, %s43, %s44
    %p48 = pneg %p42
    %p49 = scmp.eq.s32.totalorder %s12, 1
    %p50 = por %p48, %p49
    %p51 = scmp.ne.s32.totalorder %s43, %s46
    %p52 = scmp.eq.s32.totalorder %s12, 0
    %p53 = por %p51, %p52
    %p54 = scmp.ne.s32.totalorder %s43, %s46
    %p55 = scmp.eq.s32.totalorder %s17, 1
    %p56 = por %p54, %p55
    %p57 = scmp.ne.s32.totalorder %s46, %s47
    %p58 = scmp.eq.s32.totalorder %s17, 0
    %p59 = por %p57, %p58
    %p60 = scmp.ne.s32.totalorder %s46, %s47
    %p61 = scmp.eq.s32.totalorder %s18, 1
    %p62 = por %p60, %p61
    %p64 = scmp.ne.s32.totalorder %s47, %s63
    %p65 = scmp.eq.s32.totalorder %s18, 0
    %p66 = por %p64, %p65
    %s68 = sadd.s32 %s67, 1
    %p71 = scmp.eq.s32.totalorder %s12, 1
    %p72 = scmp.ne.s32.totalorder %s67, %s69
    %p73 = scmp.eq.s32.totalorder %s12, 0
    %p74 = por %p72, %p73
    %p75 = scmp.ne.s32.totalorder %s67, %s69
    %p76 = scmp.eq.s32.totalorder %s17, 1
    %p77 = por %p75, %p76
    %p78 = scmp.ne.s32.totalorder %s69, %s70
    %p79 = scmp.eq.s32.totalorder %s17, 0
    %p80 = por %p78, %p79
    %p81 = scmp.ne.s32.totalorder %s69, %s70
    %p82 = scmp.eq.s32.totalorder %s18, 1
    %p83 = por %p81, %p82
    %p85 = scmp.ne.s32.totalorder %s70, %s84
    %p86 = scmp.eq.s32.totalorder %s18, 0
    %p87 = por %p85, %p86
    %s89 = sadd.s32 %s88, 1
    %p92 = scmp.eq.s32.totalorder %s12, 1
    %p93 = scmp.ne.s32.totalorder %s88, %s90
    %p94 = scmp.eq.s32.totalorder %s12, 0
    %p95 = por %p93, %p94
    %p96 = scmp.ne.s32.totalorder %s88, %s90
    %p97 = scmp.eq.s32.totalorder %s17, 1
    %p98 = por %p96, %p97
    %p99 = scmp.ne.s32.totalorder %s90, %s91
    %p100 = scmp.eq.s32.totalorder %s17, 0
    %p101 = por %p99, %p100
    %p102 = scmp.ne.s32.totalorder %s90, %s91
    %p103 = scmp.eq.s32.totalorder %s18, 1
    %p104 = por %p102, %p103
    %p106 = scmp.ne.s32.totalorder %s91, %s105
    %p107 = scmp.eq.s32.totalorder %s18, 0
    %p108 = por %p106, %p107
    %s110 = sadd.s32 %s109, 1
    %p113 = scmp.eq.s32.totalorder %s12, 1
    %p114 = scmp.ne.s32.totalorder %s109, %s111
    %p115 = scmp.eq.s32.totalorder %s12, 0
    %p116 = por %p114, %p115
    %p117 = scmp.ne.s32.totalorder %s109, %s111
    %p118 = scmp.eq.s32.totalorder %s17, 1
    %p119 = por %p117, %p118
    %p120 = scmp.ne.s32.totalorder %s111, %s112
    %p121 = scmp.eq.s32.totalorder %s17, 0
    %p122 = por %p120, %p121
    %p123 = scmp.ne.s32.totalorder %s111, %s112
    %p124 = scmp.eq.s32.totalorder %s18, 1
    %p125 = por %p123, %p124
    %p127 = scmp.ne.s32.totalorder %s112, %s126
    %p128 = scmp.eq.s32.totalorder %s18, 0
    %p129 = por %p127, %p128
    %s131 = sadd.s32 %s130, 1
    %p134 = scmp.eq.s32.totalorder %s12, 1
    %p135 = scmp.ne.s32.totalorder %s130, %s132
    %p136 = scmp.eq.s32.totalorder %s12, 0
    %p137 = por %p135, %p136
    %p138 = scmp.ne.s32.totalorder %s130, %s132
    %p139 = scmp.eq.s32.totalorder %s17, 1
    %p140 = por %p138, %p139
    %p141 = scmp.ne.s32.totalorder %s132, %s133
    %p142 = scmp.eq.s32.totalorder %s17, 0
    %p143 = por %p141, %p142
    %p144 = scmp.ne.s32.totalorder %s132, %s133
    %p145 = scmp.eq.s32.totalorder %s18, 1
    %p146 = por %p144, %p145
    %p148 = scmp.ne.s32.totalorder %s133, %s147
    %p149 = scmp.eq.s32.totalorder %s18, 0
    %p150 = por %p148, %p149
    %s151 = ssub.s32 %s12, %s19
    %p152 = scmp.eq.s32.totalorder %s151, 0
    %s154 = sadd.s32 %s153, 1
    %s155 = scalar_select %p152, %s153, %s154
    %p158 = pneg %p152
    %p159 = scmp.eq.s32.totalorder %s12, 1
    %p160 = por %p158, %p159
    %p161 = scmp.ne.s32.totalorder %s153, %s156
    %p162 = scmp.eq.s32.totalorder %s12, 0
    %p163 = por %p161, %p162
    %p164 = scmp.ne.s32.totalorder %s153, %s156
    %p165 = scmp.eq.s32.totalorder %s17, 1
    %p166 = por %p164, %p165
    %p167 = scmp.ne.s32.totalorder %s156, %s157
    %p168 = scmp.eq.s32.totalorder %s17, 0
    %p169 = por %p167, %p168
    %p170 = scmp.ne.s32.totalorder %s156, %s157
    %p171 = scmp.eq.s32.totalorder %s18, 1
    %p172 = por %p170, %p171
    %p174 = scmp.ne.s32.totalorder %s157, %s173
    %p175 = scmp.eq.s32.totalorder %s18, 0
    %p176 = por %p174, %p175
    %p177 = scmp.le.s32.totalorder 1, %s12
    %p178 = scmp.lt.s32.totalorder %s12, 3
    %p179 = pnand %p177, %p178
    %p180 = pneg %p179
    // Predicated region
    $region9: #{stgcn_layer.1} parent=5 // pred_check
      _
    $region10: #{stgcn_layer.1} parent=5 // pred_check_branch
      %182 = sbr.rel (%p179) target = $region12
    $region11: #{stgcn_layer.1} parent=5 // pred_region
      %s183 = ssub.s32 %s12, 1
      // Predicated region
      $region13: #{stgcn_layer.1} parent=11 // pred_check
        %p184 = pneg %p33
      $region14: #{stgcn_layer.1} parent=11 // pred_check_branch
        %186 = sbr.rel (%p184) target = $region16
      $region15: #{stgcn_layer.1} parent=11 // pred_region
        _
      $region16: #{stgcn_layer.1} parent=11 // pred_fallthru
        _
      // Predicated region
      $region17: #{stgcn_layer.1} parent=11 // pred_check
        %p187 = pneg %p80
      $region18: #{stgcn_layer.1} parent=11 // pred_check_branch
        %189 = sbr.rel (%p187) target = $region20
      $region19: #{stgcn_layer.1} parent=11 // pred_region
        _
      $region20: #{stgcn_layer.1} parent=11 // pred_fallthru
        _
      // Predicated region
      $region21: #{stgcn_layer.1} parent=11 // pred_check
        %p190 = pneg %p101
      $region22: #{stgcn_layer.1} parent=11 // pred_check_branch
        %192 = sbr.rel (%p190) target = $region24
      $region23: #{stgcn_layer.1} parent=11 // pred_region
        _
      $region24: #{stgcn_layer.1} parent=11 // pred_fallthru
        _
      // Predicated region
      $region25: #{stgcn_layer.1} parent=11 // pred_check
        %p193 = pneg %p122
      $region26: #{stgcn_layer.1} parent=11 // pred_check_branch
        %195 = sbr.rel (%p193) target = $region28
      $region27: #{stgcn_layer.1} parent=11 // pred_region
        _
      $region28: #{stgcn_layer.1} parent=11 // pred_fallthru
        _
      // Predicated region
      $region29: #{stgcn_layer.1} parent=11 // pred_check
        %p196 = pneg %p143
      $region30: #{stgcn_layer.1} parent=11 // pred_check_branch
        %198 = sbr.rel (%p196) target = $region32
      $region31: #{stgcn_layer.1} parent=11 // pred_region
        _
      $region32: #{stgcn_layer.1} parent=11 // pred_fallthru
        _
    $region12: #{stgcn_layer.1} parent=5 // pred_fallthru
      _
    %p199 = scmp.lt.s32.totalorder %s12, 2
    // Predicated region
    $region33: #{stgcn_layer.1} parent=5 // pred_check
      %p200 = pneg %p199
    $region34: #{stgcn_layer.1} parent=5 // pred_check_branch
      %202 = sbr.rel (%p200) target = $region36
    $region35: #{stgcn_layer.1} parent=5 // pred_region
      // Predicated region
      $region37: #{stgcn_layer.1} parent=35 // pred_check
        %p203 = pneg %p53
      $region38: #{stgcn_layer.1} parent=35 // pred_check_branch
        %205 = sbr.rel (%p203) target = $region40
      $region39: #{stgcn_layer.1} parent=35 // pred_region
        %p206 = scmp.lt.s32.totalorder %s12, 1
        %s207 = scalar_select %p206, %s12, 1
        %s208 = smul.addr %s207, 2
        %s209 = smul.addr %s208, 8
        %s210 = scalar_lea.vmem %s1, %s209
      $region40: #{stgcn_layer.1} parent=35 // pred_fallthru
        _
    $region36: #{stgcn_layer.1} parent=5 // pred_fallthru
      _
    %p211 = scmp.le.s32.totalorder 1, %s12
    %p212 = scmp.lt.s32.totalorder %s12, 3
    %p213 = pnand %p211, %p212
    %p214 = pneg %p213
    // Predicated region
    $region41: #{stgcn_layer.1} parent=5 // pred_check
      _
    $region42: #{stgcn_layer.1} parent=5 // pred_check_branch
      %216 = sbr.rel (%p213) target = $region44
    $region43: #{stgcn_layer.1} parent=5 // pred_region
      %s217 = ssub.s32 %s12, 1
      %p218 = pneg %p33
      %p219 = pneg %p30
      %p220 = scmp.lt.s32.totalorder %s17, 1
      %s221 = scalar_select %p220, %s17, 1
      %s222 = smul.addr %s221, 2
      %s223 = smul.addr %s222, 8
      %s224 = scalar_lea.vmem %s1, %s223
      %p225 = pneg %p59
      %p226 = pneg %p56
      %p227 = pneg %p80
      %p228 = pneg %p77
      %p229 = pneg %p101
      %p230 = pneg %p98
      %p231 = pneg %p122
      %p232 = pneg %p119
      %p233 = pneg %p143
      %p234 = pneg %p140
      %p235 = pneg %p169
      %p236 = pneg %p166
      %p237 = scmp.lt.s32.totalorder %s17, 1
      %s238 = scalar_select %p237, %s17, 1
      %s239 = smul.addr %s238, 2
      %s240 = smul.addr %s239, 8
      %s241 = scalar_lea.vmem %s6, %s240
      %p242 = scmp.lt.s32.totalorder %s17, 1
      %s243 = scalar_select %p242, %s17, 1
      %s244 = smul.addr %s243, 2
      %s245 = smul.addr %s244, 8
      %s246 = scalar_lea.vmem %s1, %s245
      %p247 = scmp.lt.s32.totalorder %s17, 1
      %s248 = scalar_select %p247, %s17, 1
      %s249 = smul.addr %s248, 2
      %s250 = smul.addr %s249, 8
      %s251 = scalar_lea.vmem %s6, %s250
      %v252 = vld [vmem:[%s246] sm:$0xff]
      %v253 = vld [vmem:[%s246 + $0x8] sm:$0xff]
      %v254 = vld [vmem:[%s2] sm:$0xf]
      %vm255 = vcmask 31744
      %v257 = vsel %vm255, %v252, 0
      %v260 = vsel %vm255, %v253, 0
      %vm262 = vcmask 1043456
      %v264 = vsel %vm262, %v254, 0
      %266 = vmatprep.subr.mxu0 0.0
      %267 = vmatpush1.msra.mxu0 %v264
      %268 = vmatprep.subr.mxu0 0.0
      %269 = vmatpush1.msra.mxu0 0.0
      %270 = vmatprep.subr.mxu0 0.0
      %271 = vmatpush1.msra.mxu0 0.0
      %272 = vmatprep.subr.mxu0 0.0
      %273 = vmatpush1.msra.mxu0 0.0
      %274 = vmatprep.subr.mxu0 0.0
      %275 = vmatpush1.msra.mxu0 0.0
      %276 = vmatprep.subr.mxu0 0.0
      %277 = vmatpush1.msra.mxu0 0.0
      %278 = vmatprep.subr.mxu0 0.0
      %279 = vmatpush1.msra.mxu0 0.0
      %280 = vmatprep.subr.mxu0 0.0
      %281 = vmatpush1.msra.mxu0 0.0
      %282 = vmatprep.subr.mxu0 0.0
      %283 = vmatpush1.msra.mxu0 0.0
      %284 = vmatprep.subr.mxu0 0.0
      %285 = vmatpush1.msra.mxu0 0.0
      %286 = vmatprep.subr.mxu0 0.0
      %287 = vmatpush1.msra.mxu0 0.0
      %288 = vmatprep.subr.mxu0 0.0
      %289 = vmatpush1.msra.mxu0 0.0
      %290 = vmatprep.subr.mxu0 0.0
      %291 = vmatpush1.msra.mxu0 0.0
      %292 = vmatprep.subr.mxu0 0.0
      %293 = vmatpush1.msra.mxu0 0.0
      %294 = vmatprep.subr.mxu0 0.0
      %295 = vmatpush1.msra.mxu0 0.0
      %296 = vmatprep.subr.mxu0 0.0
      %297 = vmatpush1.msra.mxu0 0.0
      %298 = vmatprep.subr.mxu0 0.0
      %299 = vmatpush1.msra.mxu0 0.0
      %300 = vmatprep.subr.mxu0 0.0
      %301 = vmatpush1.msra.mxu0 0.0
      %302 = vmatprep.subr.mxu0 0.0
      %303 = vmatpush1.msra.mxu0 0.0
      %304 = vmatprep.subr.mxu0 0.0
      %305 = vmatpush1.msra.mxu0 0.0
      %306 = vmatprep.subr.mxu0 0.0
      %307 = vmatpush1.msra.mxu0 0.0
      %308 = vmatprep.subr.mxu0 0.0
      %309 = vmatpush1.msra.mxu0 0.0
      %310 = vmatprep.subr.mxu0 0.0
      %311 = vmatpush1.msra.mxu0 0.0
      %312 = vmatprep.subr.mxu0 0.0
      %313 = vmatpush1.msra.mxu0 0.0
      %314 = vmatprep.subr.mxu0 0.0
      %315 = vmatpush1.msra.mxu0 0.0
      %316 = vmatprep.subr.mxu0 0.0
      %317 = vmatpush1.msra.mxu0 0.0
      %318 = vmatprep.subr.mxu0 0.0
      %319 = vmatpush1.msra.mxu0 0.0
      %320 = vmatprep.subr.mxu0 0.0
      %321 = vmatpush1.msra.mxu0 0.0
      %322 = vmatprep.subr.mxu0 0.0
      %323 = vmatpush1.msra.mxu0 0.0
      %324 = vmatprep.subr.mxu0 0.0
      %325 = vmatpush1.msra.mxu0 0.0
      %326 = vmatprep.subr.mxu0 0.0
      %327 = vmatpush1.msra.mxu0 0.0
      %328 = vmatprep.subr.mxu0 0.0
      %329 = vmatpush1.msra.mxu0 0.0
      %330 = vmatprep.mubr.f32.mxu0 0.0
      %331 = vmatmul.mubr.f32.gmra.mrb[0].mxu0 %v257
      %v332 = vpop.f32.mrb[0].mxu0
      %v333 = vadd.f32 0.0, %v332
      %v334 = vpop.f32.mrb[0].mxu0
      %335 = vmatprep.mubr.f32.mxu0 0.0
      %336 = vmatmul.mubr.f32.gmra.mrb[0].mxu0 %v260
      %v337 = vpop.f32.mrb[0].mxu0
      %v338 = vadd.f32 0.0, %v337
      %v339 = vpop.f32.mrb[0].mxu0
      %340 = vdwg.mxu0
      %vm341 = vcmask 261120
      %342 = vst.msk [vmem:[#allocation2] sm:$0xff] %vm341, %v333
      %343 = vst.msk [vmem:[#allocation2 + $0x8] sm:$0xff] %vm341, %v338
      %v344 = vld [vmem:[%s0] sm:$0xff]
      %v345 = vld [vmem:[%s0 + $0x8] sm:$0xff]
      %vm346 = vcmask 130048
      %v348 = vsel %vm346, %v344, 0
      %v351 = vsel %vm346, %v345, 0
      %353 = vmatprep.subr.mxu0 0.0
      %354 = vmatpush1.msra.mxu0 %v252
      %355 = vmatprep.subr.mxu0 0.0
      %356 = vmatpush1.msra.mxu0 %v253
      %357 = vmatprep.subr.mxu0 0.0
      %358 = vmatpush1.msra.mxu0 0.0
      %359 = vmatprep.subr.mxu0 0.0
      %360 = vmatpush1.msra.mxu0 0.0
      %361 = vmatprep.subr.mxu0 0.0
      %362 = vmatpush1.msra.mxu0 0.0
      %363 = vmatprep.subr.mxu0 0.0
      %364 = vmatpush1.msra.mxu0 0.0
      %365 = vmatprep.subr.mxu0 0.0
      %366 = vmatpush1.msra.mxu0 0.0
      %367 = vmatprep.subr.mxu0 0.0
      %368 = vmatpush1.msra.mxu0 0.0
      %369 = vmatprep.subr.mxu0 0.0
      %370 = vmatpush1.msra.mxu0 0.0
      %371 = vmatprep.subr.mxu0 0.0
      %372 = vmatpush1.msra.mxu0 0.0
      %373 = vmatprep.subr.mxu0 0.0
      %374 = vmatpush1.msra.mxu0 0.0
      %375 = vmatprep.subr.mxu0 0.0
      %376 = vmatpush1.msra.mxu0 0.0
      %377 = vmatprep.subr.mxu0 0.0
      %378 = vmatpush1.msra.mxu0 0.0
      %379 = vmatprep.subr.mxu0 0.0
      %380 = vmatpush1.msra.mxu0 0.0
      %381 = vmatprep.subr.mxu0 0.0
      %382 = vmatpush1.msra.mxu0 0.0
      %383 = vmatprep.subr.mxu0 0.0
      %384 = vmatpush1.msra.mxu0 0.0
      %385 = vmatprep.subr.mxu0 0.0
      %386 = vmatpush1.msra.mxu0 0.0
      %387 = vmatprep.subr.mxu0 0.0
      %388 = vmatpush1.msra.mxu0 0.0
      %389 = vmatprep.subr.mxu0 0.0
      %390 = vmatpush1.msra.mxu0 0.0
      %391 = vmatprep.subr.mxu0 0.0
      %392 = vmatpush1.msra.mxu0 0.0
      %393 = vmatprep.subr.mxu0 0.0
      %394 = vmatpush1.msra.mxu0 0.0
      %395 = vmatprep.subr.mxu0 0.0
      %396 = vmatpush1.msra.mxu0 0.0
      %397 = vmatprep.subr.mxu0 0.0
      %398 = vmatpush1.msra.mxu0 0.0
      %399 = vmatprep.subr.mxu0 0.0
      %400 = vmatpush1.msra.mxu0 0.0
      %401 = vmatprep.subr.mxu0 0.0
      %402 = vmatpush1.msra.mxu0 0.0
      %403 = vmatprep.subr.mxu0 0.0
      %404 = vmatpush1.msra.mxu0 0.0
      %405 = vmatprep.subr.mxu0 0.0
      %406 = vmatpush1.msra.mxu0 0.0
      %407 = vmatprep.subr.mxu0 0.0
      %408 = vmatpush1.msra.mxu0 0.0
      %409 = vmatprep.subr.mxu0 0.0
      %410 = vmatpush1.msra.mxu0 0.0
      %411 = vmatprep.subr.mxu0 0.0
      %412 = vmatpush1.msra.mxu0 0.0
      %413 = vmatprep.subr.mxu0 0.0
      %414 = vmatpush1.msra.mxu0 0.0
      %415 = vmatprep.subr.mxu0 0.0
      %416 = vmatpush1.msra.mxu0 0.0
      %417 = vmatprep.mubr.f32.mxu0 0.0
      %418 = vmatmul.mubr.f32.gmra.mrb[0].mxu0 %v348
      %v419 = vpop.f32.mrb[0].mxu0
      %v420 = vadd.f32 0.0, %v419
      %v421 = vpop.f32.mrb[0].mxu0
      %422 = vmatprep.mubr.f32.mxu0 0.0
      %423 = vmatmul.mubr.f32.gmra.mrb[0].mxu0 %v351
      %v424 = vpop.f32.mrb[0].mxu0
      %v425 = vadd.f32 0.0, %v424
      %v426 = vpop.f32.mrb[0].mxu0
      %427 = vdwg.mxu0
      %v428 = vmul.f32 %v420, 0.5
      %v429 = vmul.f32 %v425, 0.5
      %s430 = scalar_lea.vmem %s2, 4
      %v431 = vld [vmem:[%s430] sm:$0xf]
      %v433 = vsel %vm255, %v428, 0
      %v436 = vsel %vm255, %v429, 0
      %v439 = vsel %vm262, %v431, 0
      %441 = vmatprep.subr.mxu0 0.0
      %442 = vmatpush1.msra.mxu0 %v439
      %443 = vmatprep.subr.mxu0 0.0
      %444 = vmatpush1.msra.mxu0 0.0
      %445 = vmatprep.subr.mxu0 0.0
      %446 = vmatpush1.msra.mxu0 0.0
      %447 = vmatprep.subr.mxu0 0.0
      %448 = vmatpush1.msra.mxu0 0.0
      %449 = vmatprep.subr.mxu0 0.0
      %450 = vmatpush1.msra.mxu0 0.0
      %451 = vmatprep.subr.mxu0 0.0
      %452 = vmatpush1.msra.mxu0 0.0
      %453 = vmatprep.subr.mxu0 0.0
      %454 = vmatpush1.msra.mxu0 0.0
      %455 = vmatprep.subr.mxu0 0.0
      %456 = vmatpush1.msra.mxu0 0.0
      %457 = vmatprep.subr.mxu0 0.0
      %458 = vmatpush1.msra.mxu0 0.0
      %459 = vmatprep.subr.mxu0 0.0
      %460 = vmatpush1.msra.mxu0 0.0
      %461 = vmatprep.subr.mxu0 0.0
      %462 = vmatpush1.msra.mxu0 0.0
      %463 = vmatprep.subr.mxu0 0.0
      %464 = vmatpush1.msra.mxu0 0.0
      %465 = vmatprep.subr.mxu0 0.0
      %466 = vmatpush1.msra.mxu0 0.0
      %467 = vmatprep.subr.mxu0 0.0
      %468 = vmatpush1.msra.mxu0 0.0
      %469 = vmatprep.subr.mxu0 0.0
      %470 = vmatpush1.msra.mxu0 0.0
      %471 = vmatprep.subr.mxu0 0.0
      %472 = vmatpush1.msra.mxu0 0.0
      %473 = vmatprep.subr.mxu0 0.0
      %474 = vmatpush1.msra.mxu0 0.0
      %475 = vmatprep.subr.mxu0 0.0
      %476 = vmatpush1.msra.mxu0 0.0
      %477 = vmatprep.subr.mxu0 0.0
      %478 = vmatpush1.msra.mxu0 0.0
      %479 = vmatprep.subr.mxu0 0.0
      %480 = vmatpush1.msra.mxu0 0.0
      %481 = vmatprep.subr.mxu0 0.0
      %482 = vmatpush1.msra.mxu0 0.0
      %483 = vmatprep.subr.mxu0 0.0
      %484 = vmatpush1.msra.mxu0 0.0
      %485 = vmatprep.subr.mxu0 0.0
      %486 = vmatpush1.msra.mxu0 0.0
      %487 = vmatprep.subr.mxu0 0.0
      %488 = vmatpush1.msra.mxu0 0.0
      %489 = vmatprep.subr.mxu0 0.0
      %490 = vmatpush1.msra.mxu0 0.0
      %491 = vmatprep.subr.mxu0 0.0
      %492 = vmatpush1.msra.mxu0 0.0
      %493 = vmatprep.subr.mxu0 0.0
      %494 = vmatpush1.msra.mxu0 0.0
      %495 = vmatprep.subr.mxu0 0.0
      %496 = vmatpush1.msra.mxu0 0.0
      %497 = vmatprep.subr.mxu0 0.0
      %498 = vmatpush1.msra.mxu0 0.0
      %499 = vmatprep.subr.mxu0 0.0
      %500 = vmatpush1.msra.mxu0 0.0
      %501 = vmatprep.subr.mxu0 0.0
      %502 = vmatpush1.msra.mxu0 0.0
      %503 = vmatprep.subr.mxu0 0.0
      %504 = vmatpush1.msra.mxu0 0.0
      %505 = vmatprep.mubr.f32.mxu0 0.0
      %506 = vmatmul.mubr.f32.gmra.mrb[0].mxu0 %v433
      %v507 = vpop.f32.mrb[0].mxu0
      %v508 = vadd.f32 0.0, %v507
      %v509 = vpop.f32.mrb[0].mxu0
      %510 = vmatprep.mubr.f32.mxu0 0.0
      %511 = vmatmul.mubr.f32.gmra.mrb[0].mxu0 %v436
      %v512 = vpop.f32.mrb[0].mxu0
      %v513 = vadd.f32 0.0, %v512
      %v514 = vpop.f32.mrb[0].mxu0
      %515 = vdwg.mxu0
      %v516 = vld [vmem:[#allocation2] sm:$0xff]
      %v517 = vld [vmem:[#allocation2 + $0x8] sm:$0xff]
      %v518 = vadd.f32 %v516, %v508
      %v519 = vadd.f32 %v517, %v513
      %520 = vst.msk [vmem:[#allocation2] sm:$0xff] %vm341, %v518
      %521 = vst.msk [vmem:[#allocation2 + $0x8] sm:$0xff] %vm341, %v519
      %522 = vmatprep.subr.mxu0 0.0
      %523 = vmatpush1.msra.mxu0 %v428
      %524 = vmatprep.subr.mxu0 0.0
      %525 = vmatpush1.msra.mxu0 %v429
      %526 = vmatprep.subr.mxu0 0.0
      %527 = vmatpush1.msra.mxu0 0.0
      %528 = vmatprep.subr.mxu0 0.0
      %529 = vmatpush1.msra.mxu0 0.0
      %530 = vmatprep.subr.mxu0 0.0
      %531 = vmatpush1.msra.mxu0 0.0
      %532 = vmatprep.subr.mxu0 0.0
      %533 = vmatpush1.msra.mxu0 0.0
      %534 = vmatprep.subr.mxu0 0.0
      %535 = vmatpush1.msra.mxu0 0.0
      %536 = vmatprep.subr.mxu0 0.0
      %537 = vmatpush1.msra.mxu0 0.0
      %538 = vmatprep.subr.mxu0 0.0
      %539 = vmatpush1.msra.mxu0 0.0
      %540 = vmatprep.subr.mxu0 0.0
      %541 = vmatpush1.msra.mxu0 0.0
      %542 = vmatprep.subr.mxu0 0.0
      %543 = vmatpush1.msra.mxu0 0.0
      %544 = vmatprep.subr.mxu0 0.0
      %545 = vmatpush1.msra.mxu0 0.0
      %546 = vmatprep.subr.mxu0 0.0
      %547 = vmatpush1.msra.mxu0 0.0
      %548 = vmatprep.subr.mxu0 0.0
      %549 = vmatpush1.msra.mxu0 0.0
      %550 = vmatprep.subr.mxu0 0.0
      %551 = vmatpush1.msra.mxu0 0.0
      %552 = vmatprep.subr.mxu0 0.0
      %553 = vmatpush1.msra.mxu0 0.0
      %554 = vmatprep.subr.mxu0 0.0
      %555 = vmatpush1.msra.mxu0 0.0
      %556 = vmatprep.subr.mxu0 0.0
      %557 = vmatpush1.msra.mxu0 0.0
      %558 = vmatprep.subr.mxu0 0.0
      %559 = vmatpush1.msra.mxu0 0.0
      %560 = vmatprep.subr.mxu0 0.0
      %561 = vmatpush1.msra.mxu0 0.0
      %562 = vmatprep.subr.mxu0 0.0
      %563 = vmatpush1.msra.mxu0 0.0
      %564 = vmatprep.subr.mxu0 0.0
      %565 = vmatpush1.msra.mxu0 0.0
      %566 = vmatprep.subr.mxu0 0.0
      %567 = vmatpush1.msra.mxu0 0.0
      %568 = vmatprep.subr.mxu0 0.0
      %569 = vmatpush1.msra.mxu0 0.0
      %570 = vmatprep.subr.mxu0 0.0
      %571 = vmatpush1.msra.mxu0 0.0
      %572 = vmatprep.subr.mxu0 0.0
      %573 = vmatpush1.msra.mxu0 0.0
      %574 = vmatprep.subr.mxu0 0.0
      %575 = vmatpush1.msra.mxu0 0.0
      %576 = vmatprep.subr.mxu0 0.0
      %577 = vmatpush1.msra.mxu0 0.0
      %578 = vmatprep.subr.mxu0 0.0
      %579 = vmatpush1.msra.mxu0 0.0
      %580 = vmatprep.subr.mxu0 0.0
      %581 = vmatpush1.msra.mxu0 0.0
      %582 = vmatprep.subr.mxu0 0.0
      %583 = vmatpush1.msra.mxu0 0.0
      %584 = vmatprep.subr.mxu0 0.0
      %585 = vmatpush1.msra.mxu0 0.0
      %586 = vmatprep.mubr.f32.mxu0 0.0
      %587 = vmatmul.mubr.f32.gmra.mrb[0].mxu0 %v348
      %v588 = vpop.f32.mrb[0].mxu0
      %v589 = vadd.f32 0.0, %v588
      %v590 = vpop.f32.mrb[0].mxu0
      %591 = vmatprep.mubr.f32.mxu0 0.0
      %592 = vmatmul.mubr.f32.gmra.mrb[0].mxu0 %v351
      %v593 = vpop.f32.mrb[0].mxu0
      %v594 = vadd.f32 0.0, %v593
      %v595 = vpop.f32.mrb[0].mxu0
      %596 = vdwg.mxu0
      %v597 = vsub.f32 %v589, %v252
      %v598 = vsub.f32 %v594, %v253
      %s599 = scalar_lea.vmem %s2, 8
      %v600 = vld [vmem:[%s599] sm:$0xf]
      %v602 = vsel %vm255, %v597, 0
      %v605 = vsel %vm255, %v598, 0
      %v608 = vsel %vm262, %v600, 0
      %610 = vmatprep.subr.mxu0 0.0
      %611 = vmatpush1.msra.mxu0 %v608
      %612 = vmatprep.subr.mxu0 0.0
      %613 = vmatpush1.msra.mxu0 0.0
      %614 = vmatprep.subr.mxu0 0.0
      %615 = vmatpush1.msra.mxu0 0.0
      %616 = vmatprep.subr.mxu0 0.0
      %617 = vmatpush1.msra.mxu0 0.0
      %618 = vmatprep.subr.mxu0 0.0
      %619 = vmatpush1.msra.mxu0 0.0
      %620 = vmatprep.subr.mxu0 0.0
      %621 = vmatpush1.msra.mxu0 0.0
      %622 = vmatprep.subr.mxu0 0.0
      %623 = vmatpush1.msra.mxu0 0.0
      %624 = vmatprep.subr.mxu0 0.0
      %625 = vmatpush1.msra.mxu0 0.0
      %626 = vmatprep.subr.mxu0 0.0
      %627 = vmatpush1.msra.mxu0 0.0
      %628 = vmatprep.subr.mxu0 0.0
      %629 = vmatpush1.msra.mxu0 0.0
      %630 = vmatprep.subr.mxu0 0.0
      %631 = vmatpush1.msra.mxu0 0.0
      %632 = vmatprep.subr.mxu0 0.0
      %633 = vmatpush1.msra.mxu0 0.0
      %634 = vmatprep.subr.mxu0 0.0
      %635 = vmatpush1.msra.mxu0 0.0
      %636 = vmatprep.subr.mxu0 0.0
      %637 = vmatpush1.msra.mxu0 0.0
      %638 = vmatprep.subr.mxu0 0.0
      %639 = vmatpush1.msra.mxu0 0.0
      %640 = vmatprep.subr.mxu0 0.0
      %641 = vmatpush1.msra.mxu0 0.0
      %642 = vmatprep.subr.mxu0 0.0
      %643 = vmatpush1.msra.mxu0 0.0
      %644 = vmatprep.subr.mxu0 0.0
      %645 = vmatpush1.msra.mxu0 0.0
      %646 = vmatprep.subr.mxu0 0.0
      %647 = vmatpush1.msra.mxu0 0.0
      %648 = vmatprep.subr.mxu0 0.0
      %649 = vmatpush1.msra.mxu0 0.0
      %650 = vmatprep.subr.mxu0 0.0
      %651 = vmatpush1.msra.mxu0 0.0
      %652 = vmatprep.subr.mxu0 0.0
      %653 = vmatpush1.msra.mxu0 0.0
      %654 = vmatprep.subr.mxu0 0.0
      %655 = vmatpush1.msra.mxu0 0.0
      %656 = vmatprep.subr.mxu0 0.0
      %657 = vmatpush1.msra.mxu0 0.0
      %658 = vmatprep.subr.mxu0 0.0
      %659 = vmatpush1.msra.mxu0 0.0
      %660 = vmatprep.subr.mxu0 0.0
      %661 = vmatpush1.msra.mxu0 0.0
      %662 = vmatprep.subr.mxu0 0.0
      %663 = vmatpush1.msra.mxu0 0.0
      %664 = vmatprep.subr.mxu0 0.0
      %665 = vmatpush1.msra.mxu0 0.0
      %666 = vmatprep.subr.mxu0 0.0
      %667 = vmatpush1.msra.mxu0 0.0
      %668 = vmatprep.subr.mxu0 0.0
      %669 = vmatpush1.msra.mxu0 0.0
      %670 = vmatprep.subr.mxu0 0.0
      %671 = vmatpush1.msra.mxu0 0.0
      %672 = vmatprep.subr.mxu0 0.0
      %673 = vmatpush1.msra.mxu0 0.0
      %674 = vmatprep.mubr.f32.mxu0 0.0
      %675 = vmatmul.mubr.f32.gmra.mrb[0].mxu0 %v602
      %v676 = vpop.f32.mrb[0].mxu0
      %v677 = vadd.f32 0.0, %v676
      %v678 = vpop.f32.mrb[0].mxu0
      %679 = vmatprep.mubr.f32.mxu0 0.0
      %680 = vmatmul.mubr.f32.gmra.mrb[0].mxu0 %v605
      %v681 = vpop.f32.mrb[0].mxu0
      %v682 = vadd.f32 0.0, %v681
      %v683 = vpop.f32.mrb[0].mxu0
      %684 = vdwg.mxu0
      %v685 = vld [vmem:[#allocation2] sm:$0xff]
      %v686 = vld [vmem:[#allocation2 + $0x8] sm:$0xff]
      %v687 = vadd.f32 %v685, %v677
      %v688 = vadd.f32 %v686, %v682
      %689 = vst.msk [vmem:[#allocation2] sm:$0xff] %vm341, %v687
      %690 = vst.msk [vmem:[#allocation2 + $0x8] sm:$0xff] %vm341, %v688
      %v691 = vld [vmem:[%s3] sm:$0x1]
      %v692 = vld [vmem:[%s5] sm:$0x1]
      %v693 = vld [vmem:[%s4] sm:$0xff]
      %v694 = vld [vmem:[%s4 + $0x8] sm:$0xff]
      %v695 = vld [vmem:[%s4 + $0x10] sm:$0xff]
      %v696 = vld [vmem:[%s4 + $0x18] sm:$0xff]
      %v697 = vld [vmem:[#allocation2] sm:$0xff]
      %v698 = vld [vmem:[#allocation2 + $0x8] sm:$0xff]
      %v700 = vlaneseq
      %v701 = vshrl.u32 %v700, 7
      %v702 = vsub.s32 0, %v701
      %v703 = vrot.slane %v691, %v702
      %v705 = vadd.f32 %v697, %v703
      %v706 = vadd.f32 %v698, %v703
      %v707 = vmax.f32 %v705, 0.0
      %v708 = vmax.f32 %v706, 0.0
      %v710 = vlaneseq
      %v711 = vshrl.u32 %v710, 7
      %v712 = vsub.s32 0, %v711
      %v713 = vrot.slane %v692, %v712
      %v716 = vsel %vm341, %v707, 0
      %v719 = vsel %vm341, %v708, 0
      %721 = vmatprep.subr.mxu0 0.0
      %722 = vmatpush1.msra.mxu0 %v693
      %723 = vmatprep.subr.mxu0 0.0
      %724 = vmatpush1.msra.mxu0 %v694
      %725 = vmatprep.subr.mxu0 0.0
      %726 = vmatpush1.msra.mxu0 %v695
      %727 = vmatprep.subr.mxu0 0.0
      %728 = vmatpush1.msra.mxu0 %v696
      %729 = vmatprep.subr.mxu0 0.0
      %730 = vmatpush1.msra.mxu0 0.0
      %731 = vmatprep.subr.mxu0 0.0
      %732 = vmatpush1.msra.mxu0 0.0
      %733 = vmatprep.subr.mxu0 0.0
      %734 = vmatpush1.msra.mxu0 0.0
      %735 = vmatprep.subr.mxu0 0.0
      %736 = vmatpush1.msra.mxu0 0.0
      %737 = vmatprep.subr.mxu0 0.0
      %738 = vmatpush1.msra.mxu0 0.0
      %739 = vmatprep.subr.mxu0 0.0
      %740 = vmatpush1.msra.mxu0 0.0
      %741 = vmatprep.subr.mxu0 0.0
      %742 = vmatpush1.msra.mxu0 0.0
      %743 = vmatprep.subr.mxu0 0.0
      %744 = vmatpush1.msra.mxu0 0.0
      %745 = vmatprep.subr.mxu0 0.0
      %746 = vmatpush1.msra.mxu0 0.0
      %747 = vmatprep.subr.mxu0 0.0
      %748 = vmatpush1.msra.mxu0 0.0
      %749 = vmatprep.subr.mxu0 0.0
      %750 = vmatpush1.msra.mxu0 0.0
      %751 = vmatprep.subr.mxu0 0.0
      %752 = vmatpush1.msra.mxu0 0.0
      %753 = vmatprep.subr.mxu0 0.0
      %754 = vmatpush1.msra.mxu0 0.0
      %755 = vmatprep.subr.mxu0 0.0
      %756 = vmatpush1.msra.mxu0 0.0
      %757 = vmatprep.subr.mxu0 0.0
      %758 = vmatpush1.msra.mxu0 0.0
      %759 = vmatprep.subr.mxu0 0.0
      %760 = vmatpush1.msra.mxu0 0.0
      %761 = vmatprep.subr.mxu0 0.0
      %762 = vmatpush1.msra.mxu0 0.0
      %763 = vmatprep.subr.mxu0 0.0
      %764 = vmatpush1.msra.mxu0 0.0
      %765 = vmatprep.subr.mxu0 0.0
      %766 = vmatpush1.msra.mxu0 0.0
      %767 = vmatprep.subr.mxu0 0.0
      %768 = vmatpush1.msra.mxu0 0.0
      %769 = vmatprep.subr.mxu0 0.0
      %770 = vmatpush1.msra.mxu0 0.0
      %771 = vmatprep.subr.mxu0 0.0
      %772 = vmatpush1.msra.mxu0 0.0
      %773 = vmatprep.subr.mxu0 0.0
      %774 = vmatpush1.msra.mxu0 0.0
      %775 = vmatprep.subr.mxu0 0.0
      %776 = vmatpush1.msra.mxu0 0.0
      %777 = vmatprep.subr.mxu0 0.0
      %778 = vmatpush1.msra.mxu0 0.0
      %779 = vmatprep.subr.mxu0 0.0
      %780 = vmatpush1.msra.mxu0 0.0
      %781 = vmatprep.subr.mxu0 0.0
      %782 = vmatpush1.msra.mxu0 0.0
      %783 = vmatprep.subr.mxu0 0.0
      %784 = vmatpush1.msra.mxu0 0.0
      %785 = vmatprep.mubr.f32.mxu0 0.0
      %786 = vmatmul.mubr.f32.gmra.mrb[0].mxu0 %v716
      %v787 = vpop.f32.mrb[0].mxu0
      %v788 = vadd.f32 %v713, %v787
      %v789 = vpop.f32.mrb[0].mxu0
      %790 = vmatprep.mubr.f32.mxu0 0.0
      %791 = vmatmul.mubr.f32.gmra.mrb[0].mxu0 %v719
      %v792 = vpop.f32.mrb[0].mxu0
      %v793 = vadd.f32 %v713, %v792
      %v794 = vpop.f32.mrb[0].mxu0
      %795 = vdwg.mxu0
      %796 = vst.msk [vmem:[%s251] sm:$0xff] %vm255, %v788
      %797 = vst.msk [vmem:[%s251 + $0x8] sm:$0xff] %vm255, %v793
      %p798 = scmp.lt.s32.totalorder %s17, 1
      %s799 = scalar_select %p798, %s17, 1
      %s800 = smul.addr %s799, 2
      %s801 = smul.addr %s800, 8
      %s802 = scalar_lea.vmem %s6, %s801
      // Predicated region
      $region45: #{stgcn_layer.1} parent=43 // pred_check
        %p803 = pneg %p166
      $region46: #{stgcn_layer.1} parent=43 // pred_check_branch
        %805 = sbr.rel (%p803) target = $region48
      $region47: #{stgcn_layer.1} parent=43 // pred_region
        _
      $region48: #{stgcn_layer.1} parent=43 // pred_fallthru
        _
    $region44: #{stgcn_layer.1} parent=5 // pred_fallthru
      _
    %p806 = scmp.le.s32.totalorder 2, %s12
    // Predicated region
    $region49: #{stgcn_layer.1} parent=5 // pred_check
      %p807 = pneg %p806
    $region50: #{stgcn_layer.1} parent=5 // pred_check_branch
      %809 = sbr.rel (%p807) target = $region52
    $region51: #{stgcn_layer.1} parent=5 // pred_region
      %s810 = ssub.s32 %s12, 2
      // Predicated region
      $region53: #{stgcn_layer.1} parent=51 // pred_check
        %p811 = pneg %p172
      $region54: #{stgcn_layer.1} parent=51 // pred_check_branch
        %813 = sbr.rel (%p811) target = $region56
      $region55: #{stgcn_layer.1} parent=51 // pred_region
        %p814 = scmp.lt.s32.totalorder %s18, 1
        %s815 = scalar_select %p814, %s18, 1
        %s816 = smul.addr %s815, 2
        %s817 = smul.addr %s816, 8
        %s818 = scalar_lea.vmem %s6, %s817
      $region56: #{stgcn_layer.1} parent=51 // pred_fallthru
        _
    $region52: #{stgcn_layer.1} parent=5 // pred_fallthru
      _
  $region6: #{stgcn_layer.1} parent=0 // loop_footer
    %s16 = sadd.s32 1, %s12
  $region7: #{stgcn_layer.1} parent=0 // loop_footer_branch
    %11 = sbr.rel target = $region3
  $region8: #{stgcn_layer.1} parent=0 // loop_exit
    _

</llo_original>
